<compile_context>
chip_gen: v7x
topology: tpu7x:2x2x1
jax: 0.10.0
libtpu: 0.0.40
codegen_flags: <defaults>
</compile_context>

<pallas_src>
import jax
import jax.numpy as jnp
from jax import lax
from jax.experimental import pallas as pl
from jax.experimental.pallas import tpu as pltpu


def _round_up(x, m):
    return ((x + m - 1) // m) * m


def _sublane_align(dtype):
    # Native sublane packing: 8 rows (f32), 16 (bf16/f16), 32 (int8/fp8).
    return {4: 8, 2: 16, 1: 32}.get(jnp.dtype(dtype).itemsize, 8)


def _pick_tile(dim, align, cap):
    """Largest multiple of `align` that divides `dim` and is <= cap."""
    cap = max(align, min(cap, dim))
    t = (cap // align) * align
    while t > align:
        if dim % t == 0:
            return t
        t -= align
    return align


def _linear_kernel_acc(x_ref, w_ref, b_ref, o_ref, acc_ref):
    # x_ref: (tm, tk)   w_ref: (tn, tk)  [nn.Linear layout, no transpose]
    # b_ref: (1, tn)    o_ref: (tm, tn)  acc_ref: (tm, tn) f32, resident over k.
    k = pl.program_id(2)

    @pl.when(k == 0)
    def _():
        acc_ref[...] = jnp.zeros_like(acc_ref)

    # Contract last axis of x with last axis of w -> (tm, tn) on the MXU.
    acc_ref[...] += lax.dot_general(
        x_ref[...],
        w_ref[...],
        dimension_numbers=(((1,), (1,)), ((), ())),
        preferred_element_type=jnp.float32,
    )

    @pl.when(k == pl.num_programs(2) - 1)
    def _():
        o_ref[...] = (acc_ref[...] + b_ref[...].astype(jnp.float32)).astype(
            o_ref.dtype
        )


def _linear_kernel_single_k(x_ref, w_ref, b_ref, o_ref):
    # Fast path when the whole K dimension fits in one tile: no accumulator.
    acc = lax.dot_general(
        x_ref[...],
        w_ref[...],
        dimension_numbers=(((1,), (1,)), ((), ())),
        preferred_element_type=jnp.float32,
    )
    o_ref[...] = (acc + b_ref[...].astype(jnp.float32)).astype(o_ref.dtype)


def linear_forward(x, weight, bias, *, tm=None, tn=None, tk=None):
    """y = x @ weight.T + bias  (exactly nn.Linear forward semantics).

    weight: [out_features, in_features], bias: [out_features].
    Supports arbitrary leading batch dims on x (flattened for the kernel).
    """
    orig_shape = x.shape
    K = orig_shape[-1]
    x2 = x.reshape(-1, K)
    M = x2.shape[0]
    N = weight.shape[0]

    m_align = _sublane_align(x.dtype)

    # Pad only to the hardware minimum tile (sublane x 128 lanes).  Zero
    # padding along K is mathematically neutral; padded M/N rows/cols of the
    # output are sliced off afterwards.
    Mp = _round_up(M, m_align)
    Kp = _round_up(K, 128)
    Np = _round_up(N, 128)

    x_p = x2 if (Mp == M and Kp == K) else jnp.pad(
        x2, ((0, Mp - M), (0, Kp - K)))
    w_p = weight if (Np == N and Kp == K) else jnp.pad(
        weight, ((0, Np - N), (0, Kp - K)))
    b_p = bias.reshape(1, N)
    if Np != N:
        b_p = jnp.pad(b_p, ((0, 0), (0, Np - N)))

    # Tiles: divisors of the (minimally) padded dims, capped so the working
    # set stays well below even v7x's 64 MiB VMEM while keeping DMA amortized.
    tm = tm or _pick_tile(Mp, m_align, 512)
    tn = tn or _pick_tile(Np, 128, 1024)
    tk = tk or _pick_tile(Kp, 128, 512)

    grid_m, grid_n, grid_k = Mp // tm, Np // tn, Kp // tk

    # v7x has 2 TensorCores: make sure the parallel grid extent is >= 2 when
    # the problem allows it, so the second core is not idle.
    if grid_m * grid_n < 2:
        if tm >= 2 * m_align and (tm // 2) % m_align == 0:
            tm //= 2
        elif tn >= 256:
            tn //= 2
        grid_m, grid_n = Mp // tm, Np // tn

    # Scoped-VMEM budget: ~2x the actual working set, clamped so it raises
    # v5e's 16 MiB default when needed but never asks for v7x's full 64 MiB.
    bx = jnp.dtype(x.dtype).itemsize
    bw = jnp.dtype(weight.dtype).itemsize
    bo = jnp.dtype(x.dtype).itemsize
    working_set = (
        2 * (tm * tk * bx + tn * tk * bw + tn * 4)  # double-buffered inputs
        + 2 * tm * tn * bo                          # double-buffered output
        + tm * tn * 4                               # f32 accumulator
    )
    vmem_limit = int(min(48 << 20, max(16 << 20, 2 * working_set)))

    if grid_k == 1:
        kernel = _linear_kernel_single_k
        grid = (grid_m, grid_n)
        in_specs = [
            pl.BlockSpec((tm, tk), lambda i, j: (i, 0)),
            pl.BlockSpec((tn, tk), lambda i, j: (j, 0)),
            pl.BlockSpec((1, tn), lambda i, j: (0, j)),
        ]
        out_specs = pl.BlockSpec((tm, tn), lambda i, j: (i, j))
        scratch_shapes = []
        dim_sem = ("parallel", "parallel")
    else:
        kernel = _linear_kernel_acc
        grid = (grid_m, grid_n, grid_k)
        in_specs = [
            pl.BlockSpec((tm, tk), lambda i, j, k: (i, k)),
            pl.BlockSpec((tn, tk), lambda i, j, k: (j, k)),
            pl.BlockSpec((1, tn), lambda i, j, k: (0, j)),
        ]
        out_specs = pl.BlockSpec((tm, tn), lambda i, j, k: (i, j))
        scratch_shapes = [pltpu.VMEM((tm, tn), jnp.float32)]
        dim_sem = ("parallel", "parallel", "arbitrary")

    out_padded = pl.pallas_call(
        kernel,
        out_shape=jax.ShapeDtypeStruct((Mp, Np), x.dtype),
        grid=grid,
        in_specs=in_specs,
        out_specs=out_specs,
        scratch_shapes=scratch_shapes,
        compiler_params=pltpu.CompilerParams(
            dimension_semantics=dim_sem,
            vmem_limit_bytes=vmem_limit,
        ),
    )(x_p, w_p, b_p)

    out = out_padded[:M, :N]
    return out.reshape(*orig_shape[:-1], N)


if __name__ == "__main__":
    in_features = 32
    out_features = 16
    batch = 8

    key = jax.random.PRNGKey(0)
    kx, kw, kb = jax.random.split(key, 3)

    # Deterministic init (mimics nn.Linear uniform(-1/sqrt(in), 1/sqrt(in))).
    bound = 1.0 / (in_features ** 0.5)
    weight = jax.random.uniform(
        kw, (out_features, in_features), minval=-bound, maxval=bound,
        dtype=jnp.float32,
    )
    bias = jax.random.uniform(
        kb, (out_features,), minval=-bound, maxval=bound, dtype=jnp.float32
    )
    x = jax.random.normal(kx, (batch, in_features), dtype=jnp.float32)

    y = linear_forward(x, weight, bias)
    jax.block_until_ready(y)

    # Reference check against plain JAX.
    y_ref = x @ weight.T + bias
    assert y.shape == y_ref.shape, "shape mismatch vs reference"
    assert jnp.allclose(y, y_ref, atol=1e-5, rtol=1e-5), "mismatch vs reference"

    print("KERNEL_OK")
</pallas_src>

<mosaic_0001>
module attributes {stable_mosaic.version = 11 : i64} {
  func.func @_linear_kernel_single_k(%arg0: i32, %arg1: i32, %arg2: memref<8x128xf32, #tpu.memory_space<vmem>>, %arg3: memref<128x128xf32, #tpu.memory_space<vmem>>, %arg4: memref<1x128xf32, #tpu.memory_space<vmem>>, %arg5: memref<8x128xf32, #tpu.memory_space<vmem>>) attributes {dimension_semantics = [#tpu.dimension_semantics<parallel>, #tpu.dimension_semantics<parallel>], iteration_bounds = array<i64: 1, 1>, scalar_prefetch = 0 : i64, scratch_operands = 0 : i64, tpu.core_type = #tpu.core_type<tc>, window_params = [{transform_indices = @transform_0, window_bounds = array<i64: 8, 128>}, {transform_indices = @transform_1, window_bounds = array<i64: 128, 128>}, {transform_indices = @transform_2, window_bounds = array<i64: 1, 128>}, {transform_indices = @transform_3, window_bounds = array<i64: 8, 128>}]} {
    %c0 = arith.constant 0 : index
    %c0_0 = arith.constant 0 : index
    %0 = vector.load %arg2[%c0, %c0_0] : memref<8x128xf32, #tpu.memory_space<vmem>>, vector<8x128xf32>
    %c0_1 = arith.constant 0 : index
    %c0_2 = arith.constant 0 : index
    %1 = vector.load %arg3[%c0_1, %c0_2] : memref<128x128xf32, #tpu.memory_space<vmem>>, vector<128x128xf32>
    %cst = arith.constant dense<0.000000e+00> : vector<8x128xf32>
    %2 = tpu.matmul %0, %1, %cst {dimension_numbers = #tpu.dot_dimension_numbers<[1], [1], [0], [0], [0, 0, 1, 0], [], []>} : vector<8x128xf32>, vector<128x128xf32>, vector<8x128xf32> -> vector<8x128xf32>
    %c0_3 = arith.constant 0 : index
    %c0_4 = arith.constant 0 : index
    %3 = vector.load %arg4[%c0_3, %c0_4] : memref<1x128xf32, #tpu.memory_space<vmem>>, vector<1x128xf32>
    %4 = vector.broadcast %3 : vector<1x128xf32> to vector<8x128xf32>
    %5 = arith.addf %2, %4 : vector<8x128xf32>
    %c0_5 = arith.constant 0 : index
    %c0_6 = arith.constant 0 : index
    %6 = vector.load %arg5[%c0_5, %c0_6] : memref<8x128xf32, #tpu.memory_space<vmem>>, vector<8x128xf32>
    tpu.vector_store %arg5[%c0_5, %c0_6], %5 {strides = array<i32>} : memref<8x128xf32, #tpu.memory_space<vmem>>, vector<8x128xf32>,
    return
  }
  func.func @transform_0(%arg0: i32, %arg1: i32) -> (i32, i32) {
    %c0_i32 = arith.constant 0 : i32
    %c0_i32_0 = arith.constant 0 : i32
    return %arg0, %c0_i32 : i32, i32
  }
  func.func @transform_1(%arg0: i32, %arg1: i32) -> (i32, i32) {
    %c0_i32 = arith.constant 0 : i32
    %c0_i32_0 = arith.constant 0 : i32
    return %arg1, %c0_i32 : i32, i32
  }
  func.func @transform_2(%arg0: i32, %arg1: i32) -> (i32, i32) {
    %c0_i32 = arith.constant 0 : i32
    %c0_i32_0 = arith.constant 0 : i32
    return %c0_i32, %arg1 : i32, i32
  }
  func.func @transform_3(%arg0: i32, %arg1: i32) -> (i32, i32) {
    %c0_i32 = arith.constant 0 : i32
    return %arg0, %arg1 : i32, i32
  }
}

</mosaic_0001>

<llo_original>
// kernel: tpu_custom_call.1
$region0: #{tpu_custom_call.1}
  #allocation0 [shape = 'u32[]', space=smem, size = 0x4, offset = 0x4, fixed_abs, tag = 'smem constant byte address 0x4 - core index']
  #allocation1 [shape = 'u32[144,128]{1,0:T(1,128)}', space=vmem, size = 0x12000, scoped, tag = 'internal scratch']
  %s0 = inlined_call_operand.hbm [shape: f32[8,128], index: 0, kind: input, shape index: {}]
  %s1 = inlined_call_operand.hbm [shape: f32[128,128], index: 1, kind: input, shape index: {}]
  %s2 = inlined_call_operand.vmem [shape: f32[1,128], index: 2, kind: input, shape index: {}]
  %s3 = inlined_call_operand.hbm [shape: f32[8,128], index: 3, kind: output, shape index: {}]
  %s4 = sld [smem:[#allocation0]]
  $region30: #{tpu_custom_call.1} parent=0
    _
  %s6 = ssub.s32 1, %s4
  %s7 = scalar_select 0, %s6, %s4
  $region1: #{tpu_custom_call.1} parent=0
    #allocation2 [shape = 'u8[4096]{0}', space=vmem, size = 0x1000, scoped, tag = 'input window, operand 0, single buffered']
    #allocation3 [shape = 's32[1]{0}', space=sflag, size = 0x4, scoped, tag = 'scoped memory for tpu_custom_call.1']
    #allocation4 [shape = 's32[1]{0}', space=sflag, size = 0x4, scoped, tag = 'scoped memory for tpu_custom_call.1']
    #allocation5 [shape = 'u8[65536]{0}', space=vmem, size = 0x10000, scoped, tag = 'input window, operand 1, single buffered']
    #allocation6 [shape = 's32[1]{0}', space=sflag, size = 0x4, scoped, tag = 'scoped memory for tpu_custom_call.1']
    #allocation7 [shape = 'u8[4096]{0}', space=vmem, size = 0x1000, scoped, tag = 'output window, operand 0, single buffered']
    %8 = vsyncpa [#allocation3], 0
    %9 = vsyncpa [#allocation6], 0
    %10 = vsyncpa [#allocation4], 0
    // Predicated region
    $region2: #{tpu_custom_call.1} parent=1 // pred_check
      _
    $region3: #{tpu_custom_call.1} parent=1 // pred_check_branch
      %12 = sbr.rel (0) target = $region5
    $region4: #{tpu_custom_call.1} parent=1 // pred_region
      %s14 = ssub.s32 128, 128
      %15 = vsyncadd [#allocation3], %s14
      %s17 = sshll.u32 [#allocation2], 4
      %s18 = int_to_ptr.vmem [resolvable:$true] %s17
      %20 = dma.hbm_to_vmem [thread:$0]  %s0, 128, %s18, [#allocation3]
    $region5: #{tpu_custom_call.1} parent=1 // pred_fallthru
      _
    // Predicated region
    $region6: #{tpu_custom_call.1} parent=1 // pred_check
      _
    $region7: #{tpu_custom_call.1} parent=1 // pred_check_branch
      %22 = sbr.rel (0) target = $region9
    $region8: #{tpu_custom_call.1} parent=1 // pred_region
      %s24 = ssub.s32 2048, 2048
      %25 = vsyncadd [#allocation6], %s24
      %s26 = sshll.u32 [#allocation5], 4
      %s27 = int_to_ptr.vmem [resolvable:$true] %s26
      %32 = dma.hbm_to_vmem [thread:$0]  %s1, 2048, %s27, [#allocation6], 128, 128, 8
    $region9: #{tpu_custom_call.1} parent=1 // pred_fallthru
      _
    // Predicated region
    $region10: #{tpu_custom_call.1} parent=1 // pred_check
      _
    $region11: #{tpu_custom_call.1} parent=1 // pred_check_branch
      %34 = sbr.rel (0) target = $region13
    $region12: #{tpu_custom_call.1} parent=1 // pred_region
      _
    $region13: #{tpu_custom_call.1} parent=1 // pred_fallthru
      _
    // Predicated region
    $region14: #{tpu_custom_call.1} parent=1 // pred_check
      _
    $region15: #{tpu_custom_call.1} parent=1 // pred_check_branch
      %36 = sbr.rel (0) target = $region17
    $region16: #{tpu_custom_call.1} parent=1 // pred_region
      %37 = dma.done [#allocation3], 128
    $region17: #{tpu_custom_call.1} parent=1 // pred_fallthru
      _
    // Predicated region
    $region18: #{tpu_custom_call.1} parent=1 // pred_check
      _
    $region19: #{tpu_custom_call.1} parent=1 // pred_check_branch
      %39 = sbr.rel (0) target = $region21
    $region20: #{tpu_custom_call.1} parent=1 // pred_region
      %40 = dma.done [#allocation6], 2048
    $region21: #{tpu_custom_call.1} parent=1 // pred_fallthru
      _
    %v41 = vld [vmem:[#allocation2] sm:$0xff]
    %v42 = vld [vmem:[#allocation5] sm:$0xff]
    %v43 = vld [vmem:[#allocation5 + $0x8] sm:$0xff]
    %v44 = vld [vmem:[#allocation5 + $0x10] sm:$0xff]
    %v45 = vld [vmem:[#allocation5 + $0x18] sm:$0xff]
    %v46 = vld [vmem:[#allocation5 + $0x20] sm:$0xff]
    %v47 = vld [vmem:[#allocation5 + $0x28] sm:$0xff]
    %v48 = vld [vmem:[#allocation5 + $0x30] sm:$0xff]
    %v49 = vld [vmem:[#allocation5 + $0x38] sm:$0xff]
    %v50 = vld [vmem:[#allocation5 + $0x40] sm:$0xff]
    %v51 = vld [vmem:[#allocation5 + $0x48] sm:$0xff]
    %v52 = vld [vmem:[#allocation5 + $0x50] sm:$0xff]
    %v53 = vld [vmem:[#allocation5 + $0x58] sm:$0xff]
    %v54 = vld [vmem:[#allocation5 + $0x60] sm:$0xff]
    %v55 = vld [vmem:[#allocation5 + $0x68] sm:$0xff]
    %v56 = vld [vmem:[#allocation5 + $0x70] sm:$0xff]
    %v57 = vld [vmem:[#allocation5 + $0x78] sm:$0xff]
    %v58 = vld [vmem:[%s2] sm:$0x1]
    %v60 = vlaneseq
    %v61 = vshrl.u32 %v60, 7
    %v62 = vsub.s32 0, %v61
    %v63 = vrot.slane %v58, %v62
    %65 = vmatprep.subr.mxu0 0.0
    %66 = vmatpush1.xpose.msra.mxu0 %v42
    %67 = vmatprep.subr.mxu0 0.0
    %68 = vmatpush1.xpose.msra.mxu0 %v43
    %69 = vmatprep.subr.mxu0 0.0
    %70 = vmatpush1.xpose.msra.mxu0 %v44
    %71 = vmatprep.subr.mxu0 0.0
    %72 = vmatpush1.xpose.msra.mxu0 %v45
    %73 = vmatprep.subr.mxu0 0.0
    %74 = vmatpush1.xpose.msra.mxu0 %v46
    %75 = vmatprep.subr.mxu0 0.0
    %76 = vmatpush1.xpose.msra.mxu0 %v47
    %77 = vmatprep.subr.mxu0 0.0
    %78 = vmatpush1.xpose.msra.mxu0 %v48
    %79 = vmatprep.subr.mxu0 0.0
    %80 = vmatpush1.xpose.msra.mxu0 %v49
    %81 = vmatprep.subr.mxu0 0.0
    %82 = vmatpush1.xpose.msra.mxu0 %v50
    %83 = vmatprep.subr.mxu0 0.0
    %84 = vmatpush1.xpose.msra.mxu0 %v51
    %85 = vmatprep.subr.mxu0 0.0
    %86 = vmatpush1.xpose.msra.mxu0 %v52
    %87 = vmatprep.subr.mxu0 0.0
    %88 = vmatpush1.xpose.msra.mxu0 %v53
    %89 = vmatprep.subr.mxu0 0.0
    %90 = vmatpush1.xpose.msra.mxu0 %v54
    %91 = vmatprep.subr.mxu0 0.0
    %92 = vmatpush1.xpose.msra.mxu0 %v55
    %93 = vmatprep.subr.mxu0 0.0
    %94 = vmatpush1.xpose.msra.mxu0 %v56
    %95 = vmatprep.subr.mxu0 0.0
    %96 = vmatpush1.xpose.msra.mxu0 %v57
    %97 = vmatprep.subr.mxu0 0.0
    %98 = vmatpush1.xpose.msra.mxu0 0.0
    %99 = vmatprep.subr.mxu0 0.0
    %100 = vmatpush1.xpose.msra.mxu0 0.0
    %101 = vmatprep.subr.mxu0 0.0
    %102 = vmatpush1.xpose.msra.mxu0 0.0
    %103 = vmatprep.subr.mxu0 0.0
    %104 = vmatpush1.xpose.msra.mxu0 0.0
    %105 = vmatprep.subr.mxu0 0.0
    %106 = vmatpush1.xpose.msra.mxu0 0.0
    %107 = vmatprep.subr.mxu0 0.0
    %108 = vmatpush1.xpose.msra.mxu0 0.0
    %109 = vmatprep.subr.mxu0 0.0
    %110 = vmatpush1.xpose.msra.mxu0 0.0
    %111 = vmatprep.subr.mxu0 0.0
    %112 = vmatpush1.xpose.msra.mxu0 0.0
    %113 = vmatprep.subr.mxu0 0.0
    %114 = vmatpush1.xpose.msra.mxu0 0.0
    %115 = vmatprep.subr.mxu0 0.0
    %116 = vmatpush1.xpose.msra.mxu0 0.0
    %117 = vmatprep.subr.mxu0 0.0
    %118 = vmatpush1.xpose.msra.mxu0 0.0
    %119 = vmatprep.subr.mxu0 0.0
    %120 = vmatpush1.xpose.msra.mxu0 0.0
    %121 = vmatprep.subr.mxu0 0.0
    %122 = vmatpush1.xpose.msra.mxu0 0.0
    %123 = vmatprep.subr.mxu0 0.0
    %124 = vmatpush1.xpose.msra.mxu0 0.0
    %125 = vmatprep.subr.mxu0 0.0
    %126 = vmatpush1.xpose.msra.mxu0 0.0
    %127 = vmatprep.subr.mxu0 0.0
    %128 = vmatpush1.xpose.msra.mxu0 0.0
    %129 = vmatprep.mubr.f32.mxu0 0.0
    %130 = vmatmul.mubr.f32.gmra.mrb[0].mxu0 %v41
    %v131 = vpop.f32.mrb[0].mxu0
    %v132 = vadd.f32 %v63, %v131
    %v133 = vpop.f32.mrb[0].mxu0
    %134 = vdwg.mxu0
    %135 = vst [vmem:[#allocation7] sm:$0xff] %v132
    // Predicated region
    $region22: #{tpu_custom_call.1} parent=1 // pred_check
      _
    $region23: #{tpu_custom_call.1} parent=1 // pred_check_branch
      %137 = sbr.rel (0) target = $region25
    $region24: #{tpu_custom_call.1} parent=1 // pred_region
      %s139 = ssub.s32 128, 128
      %140 = vsyncadd [#allocation4], %s139
      %s142 = sshll.u32 [#allocation7], 4
      %s143 = int_to_ptr.vmem [resolvable:$true] %s142
      %145 = dma.vmem_to_hbm [thread:$0]  %s143, 128, %s3, [#allocation4]
    $region25: #{tpu_custom_call.1} parent=1 // pred_fallthru
      _
    // Predicated region
    $region26: #{tpu_custom_call.1} parent=1 // pred_check
      _
    $region27: #{tpu_custom_call.1} parent=1 // pred_check_branch
      %147 = sbr.rel (0) target = $region29
    $region28: #{tpu_custom_call.1} parent=1 // pred_region
      %148 = dma.done [#allocation4], 128
    $region29: #{tpu_custom_call.1} parent=1 // pred_fallthru
      _
    %149 = vsyncpa [#allocation3], 1
    %150 = vsyncpa [#allocation6], 1
    %151 = vsyncpa [#allocation4], 1

</llo_original>
